<compile_context>
chip_gen: v6e
topology: v6e:2x2x1
jax: 0.10.0
libtpu: 0.0.40
codegen_flags: <defaults>
</compile_context>

<pallas_src>
import functools

import jax
import jax.numpy as jnp
import numpy as np
from jax.experimental import pallas as pl
from jax.experimental.pallas import tpu as pltpu


def _round_up(v, m):
    return ((v + m - 1) // m) * m


def _layernorm(x, g, b, eps=1e-5):
    mu = jnp.mean(x, axis=-1, keepdims=True)
    var = jnp.mean(jnp.square(x - mu), axis=-1, keepdims=True)
    return (x - mu) * jax.lax.rsqrt(var + eps) * g + b


def room_branch_kernel(x_ref, w_ref, v_ref, out_ref, *, d, hidden, m1, m2, out_pad):
    # Static row offsets into the packed weight slab (all multiples of 16).
    r_wv = 0
    r_wf1 = r_wv + d
    r_wf2 = r_wf1 + d
    r_wm1 = r_wf2 + hidden
    r_wm2 = r_wm1 + d
    r_wm3 = r_wm2 + m1

    cdt = w_ref.dtype                                       # bf16 MXU operand dtype
    x = x_ref[...].astype(jnp.float32)                      # (bn, d)

    # --- single-head self-attention, L == 1 ------------------------------
    # softmax over one key == 1  =>  attn_out == V == x @ Wv  (exact).
    attn_out = jnp.dot(x.astype(cdt), w_ref[r_wv:r_wv + d, :d],
                       preferred_element_type=jnp.float32)

    # --- residual (exact f32) + LN1 ---------------------------------------
    xr = _layernorm(x + attn_out, v_ref[0:1, :d], v_ref[1:2, :d])

    # --- FFN + residual + LN2 ---------------------------------------------
    h = jnp.dot(xr.astype(cdt), w_ref[r_wf1:r_wf1 + d, :hidden],
                preferred_element_type=jnp.float32) + v_ref[2:3, :hidden]
    h = jnp.maximum(h, 0.0)
    ff = jnp.dot(h.astype(cdt), w_ref[r_wf2:r_wf2 + hidden, :d],
                 preferred_element_type=jnp.float32) + v_ref[3:4, :d]
    xr = _layernorm(xr + ff, v_ref[4:5, :d], v_ref[5:6, :d])

    # --- MLP head: D -> 128 -> 64 -> out_pad (dropout p=0.0 is identity) ---
    m = jnp.dot(xr.astype(cdt), w_ref[r_wm1:r_wm1 + d, :m1],
                preferred_element_type=jnp.float32) + v_ref[6:7, :m1]
    m = jnp.maximum(m, 0.0)
    m = jnp.dot(m.astype(cdt), w_ref[r_wm2:r_wm2 + m1, :m2],
                preferred_element_type=jnp.float32) + v_ref[7:8, :m2]
    m = jnp.maximum(m, 0.0)
    out = jnp.dot(m.astype(cdt), w_ref[r_wm3:r_wm3 + m2, :out_pad],
                  preferred_element_type=jnp.float32) + v_ref[8:9, :out_pad]

    out_ref[...] = out.astype(out_ref.dtype)                 # lane-dense store


def _pack_params(p, d, hidden, m1, m2, out_pad, cols):
    """Pack all weights into one bf16 (rows, cols) slab and all biases/LN
    params into one f32 (9, cols) slab.  Row offsets of every weight are
    multiples of 16 and every lane slice starts at 0."""

    def pad_cols(w):
        w = w.astype(jnp.float32)
        return jnp.pad(w, ((0, 0), (0, cols - w.shape[1])))

    wm3_p = jnp.pad(p["wm3"].astype(jnp.float32),
                    ((0, 0), (0, out_pad - p["wm3"].shape[1])))
    w_packed = jnp.concatenate(
        [pad_cols(p["wv"]), pad_cols(p["wf1"]), pad_cols(p["wf2"]),
         pad_cols(p["wm1"]), pad_cols(p["wm2"]), pad_cols(wm3_p)],
        axis=0).astype(jnp.bfloat16)

    def padv(v):
        v = v.astype(jnp.float32).reshape(1, -1)
        return jnp.pad(v, ((0, 0), (0, cols - v.shape[1])))

    bm3_p = jnp.pad(p["bm3"].astype(jnp.float32).reshape(1, -1),
                    ((0, 0), (0, out_pad - p["bm3"].shape[-1])))
    v_packed = jnp.concatenate(
        [padv(p["ln1_g"]), padv(p["ln1_b"]),
         padv(p["bf1"]), padv(p["bf2"]),
         padv(p["ln2_g"]), padv(p["ln2_b"]),
         padv(p["bm1"]), padv(p["bm2"]), padv(bm3_p)], axis=0)

    return w_packed, v_packed


def room_branch_forward(x, params, *, block_n=1024, kernel_out_dtype=jnp.bfloat16):
    n, l, d = x.shape
    assert l == 1, "RoomBranch.forward squeezes dim 1 => expects a single CLS token"
    hidden = params["wf1"].shape[1]
    m1 = params["wm1"].shape[1]
    m2 = params["wm2"].shape[1]
    num_room_types = params["wm3"].shape[1]
    out_pad = _round_up(num_room_types, 128)                  # lane-dense output
    cols = max(d, hidden, m1, m2, out_pad)

    x2d = x.reshape(n, d)                                      # stay 2-D everywhere
    w_packed, v_packed = _pack_params(params, d, hidden, m1, m2, out_pad, cols)

    # Row tile: big blocks to amortize per-grid-step overhead, but aim for an
    # even block count >= 2 so both TensorCores get work on v7x megacore.
    if n <= 8:
        bn = n
    else:
        bn = min(block_n, _round_up(pl.cdiv(n, 2), 8))
    grid = (pl.cdiv(n, bn),)

    kernel = functools.partial(room_branch_kernel,
                               d=d, hidden=hidden, m1=m1, m2=m2, out_pad=out_pad)

    flops_per_row = 2 * (d * d + d * hidden + hidden * d + d * m1 + m1 * m2 + m2 * out_pad)
    out_itemsize = jnp.dtype(kernel_out_dtype).itemsize
    bytes_accessed = (n * (d * x2d.dtype.itemsize + out_pad * out_itemsize)
                      + w_packed.size * w_packed.dtype.itemsize
                      + v_packed.size * v_packed.dtype.itemsize)
    cost = pl.CostEstimate(flops=flops_per_row * n, transcendentals=0,
                           bytes_accessed=bytes_accessed)

    out_padded = pl.pallas_call(
        kernel,
        out_shape=jax.ShapeDtypeStruct((n, out_pad), kernel_out_dtype),
        grid_spec=pltpu.PrefetchScalarGridSpec(
            num_scalar_prefetch=0,
            grid=grid,
            in_specs=[
                pl.BlockSpec((bn, d), lambda i: (i, 0)),               # activations
                pl.BlockSpec(w_packed.shape, lambda i: (0, 0)),        # bf16 weight slab (resident)
                pl.BlockSpec(v_packed.shape, lambda i: (0, 0)),        # f32 bias/LN slab (resident)
            ],
            out_specs=pl.BlockSpec((bn, out_pad), lambda i: (i, 0)),
        ),
        compiler_params=pltpu.CompilerParams(
            dimension_semantics=("parallel",)),                # shard blocks across TCs
        cost_estimate=cost,
    )(x2d, w_packed, v_packed)

    # Slice off the lane padding; cast back to f32 to match the module's output.
    return out_padded[:, :num_room_types].astype(jnp.float32)


def _reference_forward(x, p):
    """Pure-JAX f32 mirror of the full PyTorch forward (Q/K/softmax kept),
    used to verify the L==1 simplification and the bf16 compute path."""
    n, l, d = x.shape
    xf = x.reshape(n * l, d)
    q = (xf @ p["wq"]).reshape(n, l, d)
    k = (xf @ p["wk"]).reshape(n, l, d)
    v = (xf @ p["wv"]).reshape(n, l, d)
    scores = jnp.einsum("nld,nmd->nlm", q, k) / d ** 0.5
    attn = jax.nn.softmax(scores, axis=-1)
    ao = jnp.einsum("nlm,nmd->nld", attn, v)
    xr = xf + ao.reshape(n * l, d)
    xr = _layernorm(xr, p["ln1_g"], p["ln1_b"])
    h = jax.nn.relu(xr @ p["wf1"] + p["bf1"])
    xr = _layernorm(xr + h @ p["wf2"] + p["bf2"], p["ln2_g"], p["ln2_b"])
    xs = xr.reshape(n, l, d)[:, 0, :]
    m = jax.nn.relu(xs @ p["wm1"] + p["bm1"])
    m = jax.nn.relu(m @ p["wm2"] + p["bm2"])
    return m @ p["wm3"] + p["bm3"]


def init_params(key, embed_dim=48, num_room_types=10):
    hidden = embed_dim * 4
    keys = jax.random.split(key, 16)
    s = 0.05

    def w(k, shape):
        return jax.random.normal(k, shape, jnp.float32) * s

    return {
        # attention projections (no bias); wq/wk exist for the reference only —
        # the kernel exploits L==1 where they cancel out exactly.
        "wq": w(keys[0], (embed_dim, embed_dim)),
        "wk": w(keys[1], (embed_dim, embed_dim)),
        "wv": w(keys[2], (embed_dim, embed_dim)),
        # LayerNorm 1
        "ln1_g": jnp.ones((embed_dim,), jnp.float32),
        "ln1_b": jnp.zeros((embed_dim,), jnp.float32),
        # FFN
        "wf1": w(keys[3], (embed_dim, hidden)),
        "bf1": w(keys[4], (hidden,)),
        "wf2": w(keys[5], (hidden, embed_dim)),
        "bf2": w(keys[6], (embed_dim,)),
        # LayerNorm 2
        "ln2_g": jnp.ones((embed_dim,), jnp.float32),
        "ln2_b": jnp.zeros((embed_dim,), jnp.float32),
        # MLP head
        "wm1": w(keys[7], (embed_dim, 128)),
        "bm1": w(keys[8], (128,)),
        "wm2": w(keys[9], (128, 64)),
        "bm2": w(keys[10], (64,)),
        "wm3": w(keys[11], (64, num_room_types)),
        "bm3": w(keys[12], (num_room_types,)),
    }


if __name__ == "__main__":
    key = jax.random.PRNGKey(0)
    k_x, k_x2, k_x3, k_p = jax.random.split(key, 4)

    batch, seq, embed_dim, num_room_types = 2, 1, 48, 10
    params = init_params(k_p, embed_dim=embed_dim, num_room_types=num_room_types)

    # bf16 weights / bf16 writeback => compare against the f32 reference with a
    # quantization-appropriate tolerance.
    rtol = atol = 2e-2

    # Small-batch check (single block, bn == n).
    x = jax.random.normal(k_x, (batch, seq, embed_dim), jnp.float32)
    out = jax.block_until_ready(room_branch_forward(x, params))
    ref = _reference_forward(x, params)
    assert out.shape == (batch, num_room_types)
    np.testing.assert_allclose(np.asarray(out), np.asarray(ref), rtol=rtol, atol=atol)

    # Larger-batch check: 2 full 256-row blocks sharded across TensorCores.
    big_batch = 512
    xb = jax.random.normal(k_x2, (big_batch, seq, embed_dim), jnp.float32)
    outb = jax.block_until_ready(room_branch_forward(xb, params))
    refb = _reference_forward(xb, params)
    assert outb.shape == (big_batch, num_room_types)
    np.testing.assert_allclose(np.asarray(outb), np.asarray(refb), rtol=rtol, atol=atol)

    # Odd batch: exercises a partial final block (masked writeback, row-independent math).
    odd_batch = 300
    xc = jax.random.normal(k_x3, (odd_batch, seq, embed_dim), jnp.float32)
    outc = jax.block_until_ready(room_branch_forward(xc, params))
    refc = _reference_forward(xc, params)
    assert outc.shape == (odd_batch, num_room_types)
    np.testing.assert_allclose(np.asarray(outc), np.asarray(refc), rtol=rtol, atol=atol)

    print("KERNEL_OK")
</pallas_src>

<mosaic_0001>
module attributes {stable_mosaic.version = 11 : i64} {
  func.func @room_branch_kernel(%arg0: i32, %arg1: memref<2x48xf32, #tpu.memory_space<vmem>>, %arg2: memref<528x192xbf16, #tpu.memory_space<vmem>>, %arg3: memref<9x192xf32, #tpu.memory_space<vmem>>, %arg4: memref<2x128xbf16, #tpu.memory_space<vmem>>) attributes {dimension_semantics = [#tpu.dimension_semantics<parallel>], iteration_bounds = array<i64: 1>, scalar_prefetch = 0 : i64, scratch_operands = 0 : i64, tpu.core_type = #tpu.core_type<tc>, window_params = [{transform_indices = @transform_0, window_bounds = array<i64: 2, 48>}, {pipeline_mode = #tpu.pipeline_mode<synchronous>, transform_indices = @transform_1, window_bounds = array<i64: 528, 192>}, {pipeline_mode = #tpu.pipeline_mode<synchronous>, transform_indices = @transform_2, window_bounds = array<i64: 9, 192>}, {transform_indices = @transform_3, window_bounds = array<i64: 2, 128>}]} {
    %c0 = arith.constant 0 : index
    %c0_0 = arith.constant 0 : index
    %0 = vector.load %arg1[%c0, %c0_0] : memref<2x48xf32, #tpu.memory_space<vmem>>, vector<2x48xf32>
    %1 = arith.truncf %0 : vector<2x48xf32> to vector<2x48xbf16>
    %c0_1 = arith.constant 0 : index
    %c0_2 = arith.constant 0 : index
    %2 = vector.load %arg2[%c0_1, %c0_2] : memref<528x192xbf16, #tpu.memory_space<vmem>>, vector<48x48xbf16>
    %cst = arith.constant dense<0.000000e+00> : vector<2x48xf32>
    %3 = tpu.matmul %1, %2, %cst {dimension_numbers = #tpu.dot_dimension_numbers<[1], [0], [0], [1], [0, 0, 1, 1], [], []>} : vector<2x48xbf16>, vector<48x48xbf16>, vector<2x48xf32> -> vector<2x48xf32>
    %4 = arith.addf %0, %3 : vector<2x48xf32>
    %c0_3 = arith.constant 0 : index
    %c0_4 = arith.constant 0 : index
    %5 = vector.load %arg3[%c0_3, %c0_4] : memref<9x192xf32, #tpu.memory_space<vmem>>, vector<1x48xf32>
    %c1 = arith.constant 1 : index
    %c0_5 = arith.constant 0 : index
    %6 = vector.load %arg3[%c1, %c0_5] : memref<9x192xf32, #tpu.memory_space<vmem>>, vector<1x48xf32>
    %cst_6 = arith.constant dense<0.000000e+00> : vector<2xf32>
    %7 = vector.multi_reduction <add>, %4, %cst_6 [1] : vector<2x48xf32> to vector<2xf32>
    %8 = vector.shape_cast %7 : vector<2xf32> to vector<2x1xf32>
    %cst_7 = arith.constant 4.800000e+01 : f32
    %9 = vector.broadcast %cst_7 : f32 to vector<2x1xf32>
    %10 = arith.divf %8, %9 : vector<2x1xf32>
    %11 = vector.broadcast %10 : vector<2x1xf32> to vector<2x48xf32>
    %12 = arith.subf %4, %11 : vector<2x48xf32>
    %13 = arith.mulf %12, %12 : vector<2x48xf32>
    %cst_8 = arith.constant dense<0.000000e+00> : vector<2xf32>
    %14 = vector.multi_reduction <add>, %13, %cst_8 [1] : vector<2x48xf32> to vector<2xf32>
    %15 = vector.shape_cast %14 : vector<2xf32> to vector<2x1xf32>
    %cst_9 = arith.constant 4.800000e+01 : f32
    %16 = vector.broadcast %cst_9 : f32 to vector<2x1xf32>
    %17 = arith.divf %15, %16 : vector<2x1xf32>
    %18 = vector.broadcast %10 : vector<2x1xf32> to vector<2x48xf32>
    %19 = arith.subf %4, %18 : vector<2x48xf32>
    %cst_10 = arith.constant 9.99999974E-6 : f32
    %20 = vector.broadcast %cst_10 : f32 to vector<2x1xf32>
    %21 = arith.addf %17, %20 : vector<2x1xf32>
    %22 = math.rsqrt %21 : vector<2x1xf32>
    %23 = vector.broadcast %22 : vector<2x1xf32> to vector<2x48xf32>
    %24 = arith.mulf %19, %23 : vector<2x48xf32>
    %25 = vector.broadcast %5 : vector<1x48xf32> to vector<2x48xf32>
    %26 = arith.mulf %24, %25 : vector<2x48xf32>
    %27 = vector.broadcast %6 : vector<1x48xf32> to vector<2x48xf32>
    %28 = arith.addf %26, %27 : vector<2x48xf32>
    %29 = arith.truncf %28 : vector<2x48xf32> to vector<2x48xbf16>
    %c48 = arith.constant 48 : index
    %c0_11 = arith.constant 0 : index
    %30 = vector.load %arg2[%c48, %c0_11] : memref<528x192xbf16, #tpu.memory_space<vmem>>, vector<48x192xbf16>
    %cst_12 = arith.constant dense<0.000000e+00> : vector<2x192xf32>
    %31 = tpu.matmul %29, %30, %cst_12 {dimension_numbers = #tpu.dot_dimension_numbers<[1], [0], [0], [1], [0, 0, 1, 1], [], []>} : vector<2x48xbf16>, vector<48x192xbf16>, vector<2x192xf32> -> vector<2x192xf32>
    %c2 = arith.constant 2 : index
    %c0_13 = arith.constant 0 : index
    %32 = vector.load %arg3[%c2, %c0_13] : memref<9x192xf32, #tpu.memory_space<vmem>>, vector<1x192xf32>
    %33 = vector.broadcast %32 : vector<1x192xf32> to vector<2x192xf32>
    %34 = arith.addf %31, %33 : vector<2x192xf32>
    %cst_14 = arith.constant 0.000000e+00 : f32
    %35 = vector.broadcast %cst_14 : f32 to vector<2x192xf32>
    %36 = arith.maximumf %34, %35 : vector<2x192xf32>
    %37 = arith.truncf %36 : vector<2x192xf32> to vector<2x192xbf16>
    %c96 = arith.constant 96 : index
    %c0_15 = arith.constant 0 : index
    %38 = vector.load %arg2[%c96, %c0_15] : memref<528x192xbf16, #tpu.memory_space<vmem>>, vector<192x48xbf16>
    %cst_16 = arith.constant dense<0.000000e+00> : vector<2x48xf32>
    %39 = tpu.matmul %37, %38, %cst_16 {dimension_numbers = #tpu.dot_dimension_numbers<[1], [0], [0], [1], [0, 0, 1, 1], [], []>} : vector<2x192xbf16>, vector<192x48xbf16>, vector<2x48xf32> -> vector<2x48xf32>
    %c3 = arith.constant 3 : index
    %c0_17 = arith.constant 0 : index
    %40 = vector.load %arg3[%c3, %c0_17] : memref<9x192xf32, #tpu.memory_space<vmem>>, vector<1x48xf32>
    %41 = vector.broadcast %40 : vector<1x48xf32> to vector<2x48xf32>
    %42 = arith.addf %39, %41 : vector<2x48xf32>
    %43 = arith.addf %28, %42 : vector<2x48xf32>
    %c4 = arith.constant 4 : index
    %c0_18 = arith.constant 0 : index
    %44 = vector.load %arg3[%c4, %c0_18] : memref<9x192xf32, #tpu.memory_space<vmem>>, vector<1x48xf32>
    %c5 = arith.constant 5 : index
    %c0_19 = arith.constant 0 : index
    %45 = vector.load %arg3[%c5, %c0_19] : memref<9x192xf32, #tpu.memory_space<vmem>>, vector<1x48xf32>
    %cst_20 = arith.constant dense<0.000000e+00> : vector<2xf32>
    %46 = vector.multi_reduction <add>, %43, %cst_20 [1] : vector<2x48xf32> to vector<2xf32>
    %47 = vector.shape_cast %46 : vector<2xf32> to vector<2x1xf32>
    %cst_21 = arith.constant 4.800000e+01 : f32
    %48 = vector.broadcast %cst_21 : f32 to vector<2x1xf32>
    %49 = arith.divf %47, %48 : vector<2x1xf32>
    %50 = vector.broadcast %49 : vector<2x1xf32> to vector<2x48xf32>
    %51 = arith.subf %43, %50 : vector<2x48xf32>
    %52 = arith.mulf %51, %51 : vector<2x48xf32>
    %cst_22 = arith.constant dense<0.000000e+00> : vector<2xf32>
    %53 = vector.multi_reduction <add>, %52, %cst_22 [1] : vector<2x48xf32> to vector<2xf32>
    %54 = vector.shape_cast %53 : vector<2xf32> to vector<2x1xf32>
    %cst_23 = arith.constant 4.800000e+01 : f32
    %55 = vector.broadcast %cst_23 : f32 to vector<2x1xf32>
    %56 = arith.divf %54, %55 : vector<2x1xf32>
    %57 = vector.broadcast %49 : vector<2x1xf32> to vector<2x48xf32>
    %58 = arith.subf %43, %57 : vector<2x48xf32>
    %cst_24 = arith.constant 9.99999974E-6 : f32
    %59 = vector.broadcast %cst_24 : f32 to vector<2x1xf32>
    %60 = arith.addf %56, %59 : vector<2x1xf32>
    %61 = math.rsqrt %60 : vector<2x1xf32>
    %62 = vector.broadcast %61 : vector<2x1xf32> to vector<2x48xf32>
    %63 = arith.mulf %58, %62 : vector<2x48xf32>
    %64 = vector.broadcast %44 : vector<1x48xf32> to vector<2x48xf32>
    %65 = arith.mulf %63, %64 : vector<2x48xf32>
    %66 = vector.broadcast %45 : vector<1x48xf32> to vector<2x48xf32>
    %67 = arith.addf %65, %66 : vector<2x48xf32>
    %68 = arith.truncf %67 : vector<2x48xf32> to vector<2x48xbf16>
    %c288 = arith.constant 288 : index
    %c0_25 = arith.constant 0 : index
    %69 = vector.load %arg2[%c288, %c0_25] : memref<528x192xbf16, #tpu.memory_space<vmem>>, vector<48x128xbf16>
    %cst_26 = arith.constant dense<0.000000e+00> : vector<2x128xf32>
    %70 = tpu.matmul %68, %69, %cst_26 {dimension_numbers = #tpu.dot_dimension_numbers<[1], [0], [0], [1], [0, 0, 1, 1], [], []>} : vector<2x48xbf16>, vector<48x128xbf16>, vector<2x128xf32> -> vector<2x128xf32>
    %c6 = arith.constant 6 : index
    %c0_27 = arith.constant 0 : index
    %71 = vector.load %arg3[%c6, %c0_27] : memref<9x192xf32, #tpu.memory_space<vmem>>, vector<1x128xf32>
    %72 = vector.broadcast %71 : vector<1x128xf32> to vector<2x128xf32>
    %73 = arith.addf %70, %72 : vector<2x128xf32>
    %cst_28 = arith.constant 0.000000e+00 : f32
    %74 = vector.broadcast %cst_28 : f32 to vector<2x128xf32>
    %75 = arith.maximumf %73, %74 : vector<2x128xf32>
    %76 = arith.truncf %75 : vector<2x128xf32> to vector<2x128xbf16>
    %c336 = arith.constant 336 : index
    %c0_29 = arith.constant 0 : index
    %77 = vector.load %arg2[%c336, %c0_29] : memref<528x192xbf16, #tpu.memory_space<vmem>>, vector<128x64xbf16>
    %cst_30 = arith.constant dense<0.000000e+00> : vector<2x64xf32>
    %78 = tpu.matmul %76, %77, %cst_30 {dimension_numbers = #tpu.dot_dimension_numbers<[1], [0], [0], [1], [0, 0, 1, 1], [], []>} : vector<2x128xbf16>, vector<128x64xbf16>, vector<2x64xf32> -> vector<2x64xf32>
    %c7 = arith.constant 7 : index
    %c0_31 = arith.constant 0 : index
    %79 = vector.load %arg3[%c7, %c0_31] : memref<9x192xf32, #tpu.memory_space<vmem>>, vector<1x64xf32>
    %80 = vector.broadcast %79 : vector<1x64xf32> to vector<2x64xf32>
    %81 = arith.addf %78, %80 : vector<2x64xf32>
    %cst_32 = arith.constant 0.000000e+00 : f32
    %82 = vector.broadcast %cst_32 : f32 to vector<2x64xf32>
    %83 = arith.maximumf %81, %82 : vector<2x64xf32>
    %84 = arith.truncf %83 : vector<2x64xf32> to vector<2x64xbf16>
    %c464 = arith.constant 464 : index
    %c0_33 = arith.constant 0 : index
    %85 = vector.load %arg2[%c464, %c0_33] : memref<528x192xbf16, #tpu.memory_space<vmem>>, vector<64x128xbf16>
    %cst_34 = arith.constant dense<0.000000e+00> : vector<2x128xf32>
    %86 = tpu.matmul %84, %85, %cst_34 {dimension_numbers = #tpu.dot_dimension_numbers<[1], [0], [0], [1], [0, 0, 1, 1], [], []>} : vector<2x64xbf16>, vector<64x128xbf16>, vector<2x128xf32> -> vector<2x128xf32>
    %c8 = arith.constant 8 : index
    %c0_35 = arith.constant 0 : index
    %87 = vector.load %arg3[%c8, %c0_35] : memref<9x192xf32, #tpu.memory_space<vmem>>, vector<1x128xf32>
    %88 = vector.broadcast %87 : vector<1x128xf32> to vector<2x128xf32>
    %89 = arith.addf %86, %88 : vector<2x128xf32>
    %90 = arith.truncf %89 : vector<2x128xf32> to vector<2x128xbf16>
    %c0_36 = arith.constant 0 : index
    %c0_37 = arith.constant 0 : index
    %91 = vector.load %arg4[%c0_36, %c0_37] : memref<2x128xbf16, #tpu.memory_space<vmem>>, vector<2x128xbf16>
    tpu.vector_store %arg4[%c0_36, %c0_37], %90 {strides = array<i32>} : memref<2x128xbf16, #tpu.memory_space<vmem>>, vector<2x128xbf16>,
    return
  }
  func.func @transform_0(%arg0: i32) -> (i32, i32) {
    %c0_i32 = arith.constant 0 : i32
    %c0_i32_0 = arith.constant 0 : i32
    return %arg0, %c0_i32 : i32, i32
  }
  func.func @transform_1(%arg0: i32) -> (i32, i32) {
    %c0_i32 = arith.constant 0 : i32
    %c0_i32_0 = arith.constant 0 : i32
    %c0_i32_1 = arith.constant 0 : i32
    return %c0_i32, %c0_i32_0 : i32, i32
  }
  func.func @transform_2(%arg0: i32) -> (i32, i32) {
    %c0_i32 = arith.constant 0 : i32
    %c0_i32_0 = arith.constant 0 : i32
    %c0_i32_1 = arith.constant 0 : i32
    return %c0_i32, %c0_i32_0 : i32, i32
  }
  func.func @transform_3(%arg0: i32) -> (i32, i32) {
    %c0_i32 = arith.constant 0 : i32
    %c0_i32_0 = arith.constant 0 : i32
    return %arg0, %c0_i32 : i32, i32
  }
}

</mosaic_0001>

<llo_original>
// kernel: tpu_custom_call.1
$region0: #{tpu_custom_call.1}
  #allocation0 [shape = 'u32[]', space=smem, size = 0x4, offset = 0x4, fixed_abs, tag = 'smem constant byte address 0x4 - core index']
  #allocation1 [shape = 'u32[144,128]{1,0:T(1,128)}', space=vmem, size = 0x12000, scoped, tag = 'internal scratch']
  %s0 = inlined_call_operand.vmem [shape: f32[2,48], index: 0, kind: input, shape index: {}]
  %s1 = inlined_call_operand.vmem [shape: bf16[528,192], index: 1, kind: input, shape index: {}]
  %s2 = inlined_call_operand.vmem [shape: f32[9,192], index: 2, kind: input, shape index: {}]
  %s3 = inlined_call_operand.hbm [shape: bf16[2,128], index: 3, kind: output, shape index: {}]
  %s4 = sld [smem:[#allocation0]]
  $region22: #{tpu_custom_call.1} parent=0
    _
  %s6 = ssub.s32 1, %s4
  %s7 = scalar_select 0, %s6, %s4
  $region1: #{tpu_custom_call.1} parent=0
    #allocation2 [shape = 'u8[512]{0}', space=vmem, size = 0x400, scoped, tag = 'output window, operand 0, single buffered']
    #allocation3 [shape = 's32[1]{0}', space=sflag, size = 0x4, scoped, tag = 'scoped memory for tpu_custom_call.1']
    %8 = vsyncpa [#allocation3], 0
    // Predicated region
    $region2: #{tpu_custom_call.1} parent=1 // pred_check
      _
    $region3: #{tpu_custom_call.1} parent=1 // pred_check_branch
      %10 = sbr.rel (0) target = $region5
    $region4: #{tpu_custom_call.1} parent=1 // pred_region
      _
    $region5: #{tpu_custom_call.1} parent=1 // pred_fallthru
      _
    // Predicated region
    $region6: #{tpu_custom_call.1} parent=1 // pred_check
      _
    $region7: #{tpu_custom_call.1} parent=1 // pred_check_branch
      %12 = sbr.rel (0) target = $region9
    $region8: #{tpu_custom_call.1} parent=1 // pred_region
      _
    $region9: #{tpu_custom_call.1} parent=1 // pred_fallthru
      _
    // Predicated region
    $region10: #{tpu_custom_call.1} parent=1 // pred_check
      _
    $region11: #{tpu_custom_call.1} parent=1 // pred_check_branch
      %14 = sbr.rel (0) target = $region13
    $region12: #{tpu_custom_call.1} parent=1 // pred_region
      _
    $region13: #{tpu_custom_call.1} parent=1 // pred_fallthru
      _
    %v16 = vld [vmem:[%s0] sm:$0x3]
    %v17 = vpack.c.bf16 %v16, %v16
    %v18 = vld [vmem:[%s1] sm:$0xf]
    %v19 = vld [vmem:[%s1 + $0x8] sm:$0xf]
    %v20 = vld [vmem:[%s1 + $0x10] sm:$0xf]
    %v21 = vld [vmem:[%s1 + $0x18] sm:$0xf]
    %v22 = vld [vmem:[%s1 + $0x20] sm:$0xf]
    %v23 = vld [vmem:[%s1 + $0x28] sm:$0xf]
    %v30 = vunpack.c.l.b16 %v18
    %v31 = vunpack.c.l.b16 %v19
    %v32 = vunpack.c.l.b16 %v20
    %v33 = vunpack.c.l.b16 %v21
    %v34 = vunpack.c.l.b16 %v22
    %v35 = vunpack.c.l.b16 %v23
    %v36 = vpack.c.b16 %v31, %v30
    %v37 = vpack.c.b16 %v33, %v32
    %v38 = vpack.c.b16 %v35, %v34
    %vm42 = vcmask 392192
    %v44 = vsel %vm42, %v17, 0
    %46 = vmatprep.subr.bf16.mxu0 0
    %47 = vmatpush1.bf16.msra.mxu0 0
    %48 = vmatprep.subr.bf16.mxu0 0
    %49 = vmatpush1.bf16.msra.mxu0 0
    %50 = vmatprep.subr.bf16.mxu0 0
    %51 = vmatpush1.bf16.msra.mxu0 0
    %52 = vmatprep.subr.bf16.mxu0 0
    %53 = vmatpush1.bf16.msra.mxu0 0
    %54 = vmatprep.subr.bf16.mxu0 0
    %55 = vmatpush1.bf16.msra.mxu0 0
    %56 = vmatprep.subr.bf16.mxu0 0
    %57 = vmatpush1.bf16.msra.mxu0 %v38
    %58 = vmatprep.subr.bf16.mxu0 0
    %59 = vmatpush1.bf16.msra.mxu0 %v37
    %60 = vmatprep.subr.bf16.mxu0 0
    %61 = vmatpush1.bf16.msra.mxu0 %v36
    %62 = vmatprep.subr.bf16.mxu0 0
    %63 = vmatpush2.bf16.msra.mxu0 0
    %64 = vmatprep.subr.bf16.mxu0 0
    %65 = vmatpush2.bf16.msra.mxu0 0
    %66 = vmatprep.subr.bf16.mxu0 0
    %67 = vmatpush2.bf16.msra.mxu0 0
    %68 = vmatprep.subr.bf16.mxu0 0
    %69 = vmatpush2.bf16.msra.mxu0 0
    %70 = vmatprep.subr.bf16.mxu0 0
    %71 = vmatpush2.bf16.msra.mxu0 0
    %72 = vmatprep.subr.bf16.mxu0 0
    %73 = vmatpush2.bf16.msra.mxu0 0
    %74 = vmatprep.subr.bf16.mxu0 0
    %75 = vmatpush2.bf16.msra.mxu0 0
    %76 = vmatprep.subr.bf16.mxu0 0
    %77 = vmatpush2.bf16.msra.mxu0 0
    %78 = vmatprep.mubr.bf16.mxu0 0
    %79 = vmatmul.mubr.bf16.gmra.mxu0 %v44
    %v80 = vpop.f32.mrf.mxu0
    %v81 = vadd.f32 0.0, %v80
    %v82 = vpop.f32.mrf.mxu0
    %v83 = vpop.f32.mrf.mxu0
    %v84 = vpop.f32.mrf.mxu0
    %85 = vdwg.mxu0
    %v86 = vadd.f32 %v16, %v81
    %v87 = vld [vmem:[%s2] ss:$0 sm:$0xff]
    %v88 = vld [vmem:[%s2 + $0x1] ss:$0 sm:$0xff]
    %vm89 = vcmask 386048
    %v90 = vsel %vm89, %v86, 0.0
    %91 = vadd.xlane.f32.xlu0 %v90
    %v92 = vpop.xlane.xlu0 %91
    %v93 = vrcp.pop 48.0
    %v94 = vmul.f32 %v92, %v93
    %v95 = vsub.f32 %v86, %v94
    %v96 = vmul.f32 %v95, %v95
    %v97 = vsel %vm89, %v96, 0.0
    %98 = vadd.xlane.f32.xlu0 %v97
    %v99 = vpop.xlane.xlu0 %98
    %v100 = vmul.f32 %v99, %v93
    %v101 = vadd.f32 %v100, 1e-05
    %v102 = vrsqrt.pop %v101
    %v103 = vmul.f32 %v95, %v102
    %v104 = vmul.f32 %v103, %v87
    %v105 = vadd.f32 %v104, %v88
    %v106 = vpack.c.bf16 %v105, %v105
    %v107 = vld [vmem:[%s1 + $0x30] sm:$0xff]
    %v108 = vld [vmem:[%s1 + $0x38] sm:$0xff]
    %v109 = vld [vmem:[%s1 + $0x40] sm:$0xff]
    %v110 = vld [vmem:[%s1 + $0x48] sm:$0xff]
    %v111 = vld [vmem:[%s1 + $0x50] sm:$0xff]
    %v112 = vld [vmem:[%s1 + $0x58] sm:$0xff]
    %s113 = scalar_lea.vmem %s2, 2
    %v114 = vld [vmem:[%s113] ss:$8 sm:$0x3]
    %v116 = vlaneseq
    %v117 = vshrl.u32 %v116, 7
    %v118 = vsub.s32 0, %v117
    %v119 = vrot.slane %v114, %v118
    %v120 = vlaneseq
    %v121 = vshrl.u32 %v120, 7
    %v122 = vsub.s32 1, %v121
    %v123 = vrot.slane %v114, %v122
    %v132 = vunpack.c.l.b16 %v107
    %v133 = vunpack.c.h.b16 %v107
    %v134 = vunpack.c.l.b16 %v108
    %v135 = vunpack.c.h.b16 %v108
    %v136 = vunpack.c.l.b16 %v109
    %v137 = vunpack.c.h.b16 %v109
    %v138 = vunpack.c.l.b16 %v110
    %v139 = vunpack.c.h.b16 %v110
    %v140 = vunpack.c.l.b16 %v111
    %v141 = vunpack.c.h.b16 %v111
    %v142 = vunpack.c.l.b16 %v112
    %v143 = vunpack.c.h.b16 %v112
    %v144 = vpack.c.b16 %v134, %v132
    %v145 = vpack.c.b16 %v135, %v133
    %v146 = vpack.c.b16 %v138, %v136
    %v147 = vpack.c.b16 %v139, %v137
    %v148 = vpack.c.b16 %v142, %v140
    %v149 = vpack.c.b16 %v143, %v141
    %v157 = vsel %vm42, %v106, 0
    %159 = vmatprep.subr.bf16.mxu0 0
    %160 = vmatpush1.bf16.msra.mxu0 0
    %161 = vmatprep.subr.bf16.mxu0 0
    %162 = vmatpush1.bf16.msra.mxu0 0
    %163 = vmatprep.subr.bf16.mxu0 0
    %164 = vmatpush1.bf16.msra.mxu0 0
    %165 = vmatprep.subr.bf16.mxu0 0
    %166 = vmatpush1.bf16.msra.mxu0 0
    %167 = vmatprep.subr.bf16.mxu0 0
    %168 = vmatpush1.bf16.msra.mxu0 0
    %169 = vmatprep.subr.bf16.mxu0 %v149
    %170 = vmatpush1.bf16.msra.mxu0 %v148
    %171 = vmatprep.subr.bf16.mxu0 %v147
    %172 = vmatpush1.bf16.msra.mxu0 %v146
    %173 = vmatprep.subr.bf16.mxu0 %v145
    %174 = vmatpush1.bf16.msra.mxu0 %v144
    %175 = vmatprep.subr.bf16.mxu0 0
    %176 = vmatpush2.bf16.msra.mxu0 0
    %177 = vmatprep.subr.bf16.mxu0 0
    %178 = vmatpush2.bf16.msra.mxu0 0
    %179 = vmatprep.subr.bf16.mxu0 0
    %180 = vmatpush2.bf16.msra.mxu0 0
    %181 = vmatprep.subr.bf16.mxu0 0
    %182 = vmatpush2.bf16.msra.mxu0 0
    %183 = vmatprep.subr.bf16.mxu0 0
    %184 = vmatpush2.bf16.msra.mxu0 0
    %185 = vmatprep.subr.bf16.mxu0 0
    %186 = vmatpush2.bf16.msra.mxu0 0
    %187 = vmatprep.subr.bf16.mxu0 0
    %188 = vmatpush2.bf16.msra.mxu0 0
    %189 = vmatprep.subr.bf16.mxu0 0
    %190 = vmatpush2.bf16.msra.mxu0 0
    %191 = vmatprep.mubr.bf16.mxu0 0
    %192 = vmatmul.mubr.bf16.gmra.mxu0 %v157
    %v193 = vpop.f32.mrf.mxu0
    %v194 = vadd.f32 %v119, %v193
    %v195 = vpop.f32.mrf.mxu0
    %v196 = vadd.f32 %v123, %v195
    %v197 = vpop.f32.mrf.mxu0
    %v198 = vpop.f32.mrf.mxu0
    %199 = vdwg.mxu0
    %v200 = vmax.f32 %v194, 0.0
    %v201 = vmax.f32 %v196, 0.0
    %v202 = vpack.c.bf16 %v200, %v200
    %v203 = vpack.c.bf16 %v201, %v201
    %v204 = vld [vmem:[%s1 + $0x60] sm:$0xf]
    %v205 = vld [vmem:[%s1 + $0x68] sm:$0xf]
    %v206 = vld [vmem:[%s1 + $0x70] sm:$0xf]
    %v207 = vld [vmem:[%s1 + $0x78] sm:$0xf]
    %v208 = vld [vmem:[%s1 + $0x80] sm:$0xf]
    %v209 = vld [vmem:[%s1 + $0x88] sm:$0xf]
    %v210 = vld [vmem:[%s1 + $0x90] sm:$0xf]
    %v211 = vld [vmem:[%s1 + $0x98] sm:$0xf]
    %v212 = vld [vmem:[%s1 + $0xa0] sm:$0xf]
    %v213 = vld [vmem:[%s1 + $0xa8] sm:$0xf]
    %v214 = vld [vmem:[%s1 + $0xb0] sm:$0xf]
    %v215 = vld [vmem:[%s1 + $0xb8] sm:$0xf]
    %v216 = vld [vmem:[%s1 + $0xc0] sm:$0xf]
    %v217 = vld [vmem:[%s1 + $0xc8] sm:$0xf]
    %v218 = vld [vmem:[%s1 + $0xd0] sm:$0xf]
    %v219 = vld [vmem:[%s1 + $0xd8] sm:$0xf]
    %v220 = vld [vmem:[%s1 + $0xe0] sm:$0xf]
    %v221 = vld [vmem:[%s1 + $0xe8] sm:$0xf]
    %v222 = vld [vmem:[%s1 + $0xf0] sm:$0xf]
    %v223 = vld [vmem:[%s1 + $0xf8] sm:$0xf]
    %v224 = vld [vmem:[%s1 + $0x100] sm:$0xf]
    %v225 = vld [vmem:[%s1 + $0x108] sm:$0xf]
    %v226 = vld [vmem:[%s1 + $0x110] sm:$0xf]
    %v227 = vld [vmem:[%s1 + $0x118] sm:$0xf]
    %v228 = vld [vmem:[%s2 + $0x3] ss:$0 sm:$0xff]
    %v253 = vunpack.c.l.b16 %v204
    %v254 = vunpack.c.l.b16 %v205
    %v255 = vunpack.c.l.b16 %v206
    %v256 = vunpack.c.l.b16 %v207
    %v257 = vunpack.c.l.b16 %v208
    %v258 = vunpack.c.l.b16 %v209
    %v259 = vunpack.c.l.b16 %v210
    %v260 = vunpack.c.l.b16 %v211
    %v261 = vunpack.c.l.b16 %v212
    %v262 = vunpack.c.l.b16 %v213
    %v263 = vunpack.c.l.b16 %v214
    %v264 = vunpack.c.l.b16 %v215
    %v265 = vunpack.c.l.b16 %v216
    %v266 = vunpack.c.l.b16 %v217
    %v267 = vunpack.c.l.b16 %v218
    %v268 = vunpack.c.l.b16 %v219
    %v269 = vunpack.c.l.b16 %v220
    %v270 = vunpack.c.l.b16 %v221
    %v271 = vunpack.c.l.b16 %v222
    %v272 = vunpack.c.l.b16 %v223
    %v273 = vunpack.c.l.b16 %v224
    %v274 = vunpack.c.l.b16 %v225
    %v275 = vunpack.c.l.b16 %v226
    %v276 = vunpack.c.l.b16 %v227
    %v277 = vpack.c.b16 %v254, %v253
    %v278 = vpack.c.b16 %v256, %v255
    %v279 = vpack.c.b16 %v258, %v257
    %v280 = vpack.c.b16 %v260, %v259
    %v281 = vpack.c.b16 %v262, %v261
    %v282 = vpack.c.b16 %v264, %v263
    %v283 = vpack.c.b16 %v266, %v265
    %v284 = vpack.c.b16 %v268, %v267
    %v285 = vpack.c.b16 %v270, %v269
    %v286 = vpack.c.b16 %v272, %v271
    %v287 = vpack.c.b16 %v274, %v273
    %v288 = vpack.c.b16 %v276, %v275
    %vm301 = vcmask 523264
    %v303 = vsel %vm301, %v203, 0
    %305 = vmatprep.subr.bf16.mxu0 0
    %306 = vmatpush1.bf16.msra.mxu0 %v284
    %307 = vmatprep.subr.bf16.mxu0 0
    %308 = vmatpush1.bf16.msra.mxu0 %v283
    %309 = vmatprep.subr.bf16.mxu0 0
    %310 = vmatpush1.bf16.msra.mxu0 %v282
    %311 = vmatprep.subr.bf16.mxu0 0
    %312 = vmatpush1.bf16.msra.mxu0 %v281
    %313 = vmatprep.subr.bf16.mxu0 0
    %314 = vmatpush1.bf16.msra.mxu0 %v280
    %315 = vmatprep.subr.bf16.mxu0 0
    %316 = vmatpush1.bf16.msra.mxu0 %v279
    %317 = vmatprep.subr.bf16.mxu0 0
    %318 = vmatpush1.bf16.msra.mxu0 %v278
    %319 = vmatprep.subr.bf16.mxu0 0
    %320 = vmatpush1.bf16.msra.mxu0 %v277
    %321 = vmatprep.subr.bf16.mxu0 0
    %322 = vmatpush2.bf16.msra.mxu0 0
    %323 = vmatprep.subr.bf16.mxu0 0
    %324 = vmatpush2.bf16.msra.mxu0 0
    %325 = vmatprep.subr.bf16.mxu0 0
    %326 = vmatpush2.bf16.msra.mxu0 0
    %327 = vmatprep.subr.bf16.mxu0 0
    %328 = vmatpush2.bf16.msra.mxu0 0
    %329 = vmatprep.subr.bf16.mxu0 0
    %330 = vmatpush2.bf16.msra.mxu0 %v288
    %331 = vmatprep.subr.bf16.mxu0 0
    %332 = vmatpush2.bf16.msra.mxu0 %v287
    %333 = vmatprep.subr.bf16.mxu0 0
    %334 = vmatpush2.bf16.msra.mxu0 %v286
    %335 = vmatprep.subr.bf16.mxu0 0
    %336 = vmatpush2.bf16.msra.mxu0 %v285
    %337 = vmatprep.mubr.bf16.mxu0 %v303
    %338 = vmatmul.mubr.bf16.gmra.mxu0 %v202
    %v339 = vpop.f32.mrf.mxu0
    %v340 = vadd.f32 %v228, %v339
    %v341 = vpop.f32.mrf.mxu0
    %v342 = vpop.f32.mrf.mxu0
    %v343 = vpop.f32.mrf.mxu0
    %344 = vdwg.mxu0
    %v345 = vadd.f32 %v105, %v340
    %v346 = vld [vmem:[%s2 + $0x4] ss:$0 sm:$0xff]
    %v347 = vld [vmem:[%s2 + $0x5] ss:$0 sm:$0xff]
    %v348 = vsel %vm89, %v345, 0.0
    %349 = vadd.xlane.f32.xlu0 %v348
    %v350 = vpop.xlane.xlu0 %349
    %v351 = vmul.f32 %v350, %v93
    %v352 = vsub.f32 %v345, %v351
    %v353 = vmul.f32 %v352, %v352
    %v354 = vsel %vm89, %v353, 0.0
    %355 = vadd.xlane.f32.xlu0 %v354
    %v356 = vpop.xlane.xlu0 %355
    %v357 = vmul.f32 %v356, %v93
    %v358 = vadd.f32 %v357, 1e-05
    %v359 = vrsqrt.pop %v358
    %v360 = vmul.f32 %v352, %v359
    %v361 = vmul.f32 %v360, %v346
    %v362 = vadd.f32 %v361, %v347
    %v363 = vpack.c.bf16 %v362, %v362
    %v364 = vld [vmem:[%s1 + $0x120] sm:$0xf]
    %v365 = vld [vmem:[%s1 + $0x128] sm:$0xf]
    %v366 = vld [vmem:[%s1 + $0x130] sm:$0xf]
    %v367 = vld [vmem:[%s1 + $0x138] sm:$0xf]
    %v368 = vld [vmem:[%s1 + $0x140] sm:$0xf]
    %v369 = vld [vmem:[%s1 + $0x148] sm:$0xf]
    %v370 = vld [vmem:[%s2 + $0x6] ss:$0 sm:$0xff]
    %v377 = vunpack.c.l.b16 %v364
    %v378 = vunpack.c.l.b16 %v365
    %v379 = vunpack.c.l.b16 %v366
    %v380 = vunpack.c.l.b16 %v367
    %v381 = vunpack.c.l.b16 %v368
    %v382 = vunpack.c.l.b16 %v369
    %v383 = vpack.c.b16 %v378, %v377
    %v384 = vpack.c.b16 %v380, %v379
    %v385 = vpack.c.b16 %v382, %v381
    %v390 = vsel %vm42, %v363, 0
    %392 = vmatprep.subr.bf16.mxu0 0
    %393 = vmatpush1.bf16.msra.mxu0 0
    %394 = vmatprep.subr.bf16.mxu0 0
    %395 = vmatpush1.bf16.msra.mxu0 0
    %396 = vmatprep.subr.bf16.mxu0 0
    %397 = vmatpush1.bf16.msra.mxu0 0
    %398 = vmatprep.subr.bf16.mxu0 0
    %399 = vmatpush1.bf16.msra.mxu0 0
    %400 = vmatprep.subr.bf16.mxu0 0
    %401 = vmatpush1.bf16.msra.mxu0 0
    %402 = vmatprep.subr.bf16.mxu0 0
    %403 = vmatpush1.bf16.msra.mxu0 %v385
    %404 = vmatprep.subr.bf16.mxu0 0
    %405 = vmatpush1.bf16.msra.mxu0 %v384
    %406 = vmatprep.subr.bf16.mxu0 0
    %407 = vmatpush1.bf16.msra.mxu0 %v383
    %408 = vmatprep.subr.bf16.mxu0 0
    %409 = vmatpush2.bf16.msra.mxu0 0
    %410 = vmatprep.subr.bf16.mxu0 0
    %411 = vmatpush2.bf16.msra.mxu0 0
    %412 = vmatprep.subr.bf16.mxu0 0
    %413 = vmatpush2.bf16.msra.mxu0 0
    %414 = vmatprep.subr.bf16.mxu0 0
    %415 = vmatpush2.bf16.msra.mxu0 0
    %416 = vmatprep.subr.bf16.mxu0 0
    %417 = vmatpush2.bf16.msra.mxu0 0
    %418 = vmatprep.subr.bf16.mxu0 0
    %419 = vmatpush2.bf16.msra.mxu0 0
    %420 = vmatprep.subr.bf16.mxu0 0
    %421 = vmatpush2.bf16.msra.mxu0 0
    %422 = vmatprep.subr.bf16.mxu0 0
    %423 = vmatpush2.bf16.msra.mxu0 0
    %424 = vmatprep.mubr.bf16.mxu0 0
    %425 = vmatmul.mubr.bf16.gmra.mxu0 %v390
    %v426 = vpop.f32.mrf.mxu0
    %v427 = vadd.f32 %v370, %v426
    %v428 = vpop.f32.mrf.mxu0
    %v429 = vpop.f32.mrf.mxu0
    %v430 = vpop.f32.mrf.mxu0
    %431 = vdwg.mxu0
    %v432 = vmax.f32 %v427, 0.0
    %v433 = vpack.c.bf16 %v432, %v432
    %v434 = vld [vmem:[%s1 + $0x150] sm:$0xf]
    %v435 = vld [vmem:[%s1 + $0x158] sm:$0xf]
    %v436 = vld [vmem:[%s1 + $0x160] sm:$0xf]
    %v437 = vld [vmem:[%s1 + $0x168] sm:$0xf]
    %v438 = vld [vmem:[%s1 + $0x170] sm:$0xf]
    %v439 = vld [vmem:[%s1 + $0x178] sm:$0xf]
    %v440 = vld [vmem:[%s1 + $0x180] sm:$0xf]
    %v441 = vld [vmem:[%s1 + $0x188] sm:$0xf]
    %v442 = vld [vmem:[%s1 + $0x190] sm:$0xf]
    %v443 = vld [vmem:[%s1 + $0x198] sm:$0xf]
    %v444 = vld [vmem:[%s1 + $0x1a0] sm:$0xf]
    %v445 = vld [vmem:[%s1 + $0x1a8] sm:$0xf]
    %v446 = vld [vmem:[%s1 + $0x1b0] sm:$0xf]
    %v447 = vld [vmem:[%s1 + $0x1b8] sm:$0xf]
    %v448 = vld [vmem:[%s1 + $0x1c0] sm:$0xf]
    %v449 = vld [vmem:[%s1 + $0x1c8] sm:$0xf]
    %v450 = vld [vmem:[%s2 + $0x7] ss:$0 sm:$0xff]
    %v467 = vunpack.c.l.b16 %v434
    %v468 = vunpack.c.l.b16 %v435
    %v469 = vunpack.c.l.b16 %v436
    %v470 = vunpack.c.l.b16 %v437
    %v471 = vunpack.c.l.b16 %v438
    %v472 = vunpack.c.l.b16 %v439
    %v473 = vunpack.c.l.b16 %v440
    %v474 = vunpack.c.l.b16 %v441
    %v475 = vunpack.c.l.b16 %v442
    %v476 = vunpack.c.l.b16 %v443
    %v477 = vunpack.c.l.b16 %v444
    %v478 = vunpack.c.l.b16 %v445
    %v479 = vunpack.c.l.b16 %v446
    %v480 = vunpack.c.l.b16 %v447
    %v481 = vunpack.c.l.b16 %v448
    %v482 = vunpack.c.l.b16 %v449
    %v483 = vpack.c.b16 %v468, %v467
    %v484 = vpack.c.b16 %v470, %v469
    %v485 = vpack.c.b16 %v472, %v471
    %v486 = vpack.c.b16 %v474, %v473
    %v487 = vpack.c.b16 %v476, %v475
    %v488 = vpack.c.b16 %v478, %v477
    %v489 = vpack.c.b16 %v480, %v479
    %v490 = vpack.c.b16 %v482, %v481
    %499 = vmatprep.subr.bf16.mxu0 0
    %500 = vmatpush1.bf16.msra.mxu0 %v490
    %501 = vmatprep.subr.bf16.mxu0 0
    %502 = vmatpush1.bf16.msra.mxu0 %v489
    %503 = vmatprep.subr.bf16.mxu0 0
    %504 = vmatpush1.bf16.msra.mxu0 %v488
    %505 = vmatprep.subr.bf16.mxu0 0
    %506 = vmatpush1.bf16.msra.mxu0 %v487
    %507 = vmatprep.subr.bf16.mxu0 0
    %508 = vmatpush1.bf16.msra.mxu0 %v486
    %509 = vmatprep.subr.bf16.mxu0 0
    %510 = vmatpush1.bf16.msra.mxu0 %v485
    %511 = vmatprep.subr.bf16.mxu0 0
    %512 = vmatpush1.bf16.msra.mxu0 %v484
    %513 = vmatprep.subr.bf16.mxu0 0
    %514 = vmatpush1.bf16.msra.mxu0 %v483
    %515 = vmatprep.subr.bf16.mxu0 0
    %516 = vmatpush2.bf16.msra.mxu0 0
    %517 = vmatprep.subr.bf16.mxu0 0
    %518 = vmatpush2.bf16.msra.mxu0 0
    %519 = vmatprep.subr.bf16.mxu0 0
    %520 = vmatpush2.bf16.msra.mxu0 0
    %521 = vmatprep.subr.bf16.mxu0 0
    %522 = vmatpush2.bf16.msra.mxu0 0
    %523 = vmatprep.subr.bf16.mxu0 0
    %524 = vmatpush2.bf16.msra.mxu0 0
    %525 = vmatprep.subr.bf16.mxu0 0
    %526 = vmatpush2.bf16.msra.mxu0 0
    %527 = vmatprep.subr.bf16.mxu0 0
    %528 = vmatpush2.bf16.msra.mxu0 0
    %529 = vmatprep.subr.bf16.mxu0 0
    %530 = vmatpush2.bf16.msra.mxu0 0
    %531 = vmatprep.mubr.bf16.mxu0 0
    %532 = vmatmul.mubr.bf16.gmra.mxu0 %v433
    %v533 = vpop.f32.mrf.mxu0
    %v534 = vadd.f32 %v450, %v533
    %v535 = vpop.f32.mrf.mxu0
    %v536 = vpop.f32.mrf.mxu0
    %v537 = vpop.f32.mrf.mxu0
    %538 = vdwg.mxu0
    %v539 = vmax.f32 %v534, 0.0
    %v540 = vpack.c.bf16 %v539, %v539
    %v541 = vld [vmem:[%s1 + $0x1d0] sm:$0xf]
    %v542 = vld [vmem:[%s1 + $0x1d8] sm:$0xf]
    %v543 = vld [vmem:[%s1 + $0x1e0] sm:$0xf]
    %v544 = vld [vmem:[%s1 + $0x1e8] sm:$0xf]
    %v545 = vld [vmem:[%s1 + $0x1f0] sm:$0xf]
    %v546 = vld [vmem:[%s1 + $0x1f8] sm:$0xf]
    %v547 = vld [vmem:[%s1 + $0x200] sm:$0xf]
    %v548 = vld [vmem:[%s1 + $0x208] sm:$0xf]
    %v549 = vld [vmem:[%s2 + $0x10] ss:$0 sm:$0xff]
    %v558 = vunpack.c.l.b16 %v541
    %v559 = vunpack.c.l.b16 %v542
    %v560 = vunpack.c.l.b16 %v543
    %v561 = vunpack.c.l.b16 %v544
    %v562 = vunpack.c.l.b16 %v545
    %v563 = vunpack.c.l.b16 %v546
    %v564 = vunpack.c.l.b16 %v547
    %v565 = vunpack.c.l.b16 %v548
    %v566 = vpack.c.b16 %v559, %v558
    %v567 = vpack.c.b16 %v561, %v560
    %v568 = vpack.c.b16 %v563, %v562
    %v569 = vpack.c.b16 %v565, %v564
    %v575 = vsel %vm301, %v540, 0
    %577 = vmatprep.subr.bf16.mxu0 0
    %578 = vmatpush1.bf16.msra.mxu0 0
    %579 = vmatprep.subr.bf16.mxu0 0
    %580 = vmatpush1.bf16.msra.mxu0 0
    %581 = vmatprep.subr.bf16.mxu0 0
    %582 = vmatpush1.bf16.msra.mxu0 0
    %583 = vmatprep.subr.bf16.mxu0 0
    %584 = vmatpush1.bf16.msra.mxu0 0
    %585 = vmatprep.subr.bf16.mxu0 0
    %586 = vmatpush1.bf16.msra.mxu0 %v569
    %587 = vmatprep.subr.bf16.mxu0 0
    %588 = vmatpush1.bf16.msra.mxu0 %v568
    %589 = vmatprep.subr.bf16.mxu0 0
    %590 = vmatpush1.bf16.msra.mxu0 %v567
    %591 = vmatprep.subr.bf16.mxu0 0
    %592 = vmatpush1.bf16.msra.mxu0 %v566
    %593 = vmatprep.subr.bf16.mxu0 0
    %594 = vmatpush2.bf16.msra.mxu0 0
    %595 = vmatprep.subr.bf16.mxu0 0
    %596 = vmatpush2.bf16.msra.mxu0 0
    %597 = vmatprep.subr.bf16.mxu0 0
    %598 = vmatpush2.bf16.msra.mxu0 0
    %599 = vmatprep.subr.bf16.mxu0 0
    %600 = vmatpush2.bf16.msra.mxu0 0
    %601 = vmatprep.subr.bf16.mxu0 0
    %602 = vmatpush2.bf16.msra.mxu0 0
    %603 = vmatprep.subr.bf16.mxu0 0
    %604 = vmatpush2.bf16.msra.mxu0 0
    %605 = vmatprep.subr.bf16.mxu0 0
    %606 = vmatpush2.bf16.msra.mxu0 0
    %607 = vmatprep.subr.bf16.mxu0 0
    %608 = vmatpush2.bf16.msra.mxu0 0
    %609 = vmatprep.mubr.bf16.mxu0 0
    %610 = vmatmul.mubr.bf16.gmra.mxu0 %v575
    %v611 = vpop.f32.mrf.mxu0
    %v612 = vadd.f32 %v549, %v611
    %v613 = vpop.f32.mrf.mxu0
    %v614 = vpop.f32.mrf.mxu0
    %v615 = vpop.f32.mrf.mxu0
    %616 = vdwg.mxu0
    %v617 = vpack.c.bf16 %v612, %v612
    %618 = vst [vmem:[#allocation2] sm:$0x1] %v617
    // Predicated region
    $region14: #{tpu_custom_call.1} parent=1 // pred_check
      _
    $region15: #{tpu_custom_call.1} parent=1 // pred_check_branch
      %620 = sbr.rel (0) target = $region17
    $region16: #{tpu_custom_call.1} parent=1 // pred_region
      %s622 = ssub.s32 16, 16
      %623 = vsyncadd [#allocation3], %s622
      %s625 = sshll.u32 [#allocation2], 4
      %s626 = int_to_ptr.vmem [resolvable:$true] %s625
      %628 = dma.vmem_to_hbm [thread:$0]  %s626, 16, %s3, [#allocation3]
    $region17: #{tpu_custom_call.1} parent=1 // pred_fallthru
      _
    // Predicated region
    $region18: #{tpu_custom_call.1} parent=1 // pred_check
      _
    $region19: #{tpu_custom_call.1} parent=1 // pred_check_branch
      %630 = sbr.rel (0) target = $region21
    $region20: #{tpu_custom_call.1} parent=1 // pred_region
      %631 = dma.done [#allocation3], 16
    $region21: #{tpu_custom_call.1} parent=1 // pred_fallthru
      _
    %632 = vsyncpa [#allocation3], 1

</llo_original>
